<compile_context>
chip_gen: v7x
topology: tpu7x:2x2x1
jax: 0.10.0
libtpu: 0.0.40
codegen_flags: <defaults>
</compile_context>

<pallas_src>
import functools

import jax
import jax.numpy as jnp
import numpy as np
from jax.experimental import pallas as pl
from jax.experimental.pallas import tpu as pltpu

_NEG_SLOPE = 0.2                       # F.leaky_relu(x, 0.2) in the module
_TAPS = tuple((dy, dx) for dy in (-1, 0, 1) for dx in (-1, 0, 1))


def _leaky_relu(x):
    return jnp.where(x >= 0, x, _NEG_SLOPE * x)


# ---------------------------------------------------------------------------
# pltpu.roll direction guard (probed once, trace-time constant afterwards)
# ---------------------------------------------------------------------------
_ROLL_SIGN = None


def _get_roll_sign():
    """Probe the in-kernel pltpu.roll convention (expected to match jnp.roll:
    out[i] = x[i - shift]) so a convention difference can never silently break
    the conv tap indexing."""
    global _ROLL_SIGN
    if _ROLL_SIGN is None:
        def probe(x_ref, o_ref):
            o_ref[...] = pltpu.roll(x_ref[...], 1, axis=1)

        x = jnp.arange(256, dtype=jnp.float32).reshape(1, 256)
        y = jax.block_until_ready(
            pl.pallas_call(
                probe, out_shape=jax.ShapeDtypeStruct((1, 256), jnp.float32)
            )(x))
        _ROLL_SIGN = 1 if int(np.asarray(y)[0, 1]) == 0 else -1
    return _ROLL_SIGN


# ---------------------------------------------------------------------------
# Kernel
# ---------------------------------------------------------------------------
def _conv3x3_fused(a32, w_ref, m, W, cols, roll_sign):
    """3x3 conv (stride 1, zero pad 1) as ONE MXU contraction.

    a32:   (Cin, cols) f32 activated input, lane-dense flattened spatial.
    w_ref: (Cout, 9*Cin + 1) fused weights, tap-major, bias in last column.
    m:     (9, cols) multiplicative border masks in the compute dtype.
    returns (Cout, cols) f32.
    """
    cd = w_ref.dtype
    a_c = a32.astype(cd)
    taps = []
    for t, (dy, dx) in enumerate(_TAPS):
        if dy == 0 and dx == 0:
            taps.append(a_c)                       # center tap: always valid
        else:
            off = dy * W + dx                      # flat-index offset of tap
            shifted = pltpu.roll(a_c, (-roll_sign * off) % cols, axis=1)
            taps.append(shifted * m[t:t + 1, :])   # zero every OOB/cross-image read
    taps.append(jnp.ones((1, cols), cd))           # bias row
    k = jnp.concatenate(taps, axis=0)              # (9*Cin + 1, cols)
    return jnp.dot(w_ref[...], k, preferred_element_type=jnp.float32)


def _resnet_body(x_ref, m_ref, w0_ref, w1_ref, ws_ref, o_ref, *,
                 W, cols, roll_sign):
    x32 = x_ref[...].astype(jnp.float32)           # (Cin, cols)
    m = m_ref[...]                                  # (9, cols), resident

    h = _conv3x3_fused(_leaky_relu(x32), w0_ref, m, W, cols, roll_sign)
    dxv = _conv3x3_fused(_leaky_relu(h), w1_ref, m, W, cols, roll_sign)

    if ws_ref is None:                              # fin == fout: identity
        x_s = x32
    else:                                           # learned 1x1 shortcut
        x_s = jnp.dot(ws_ref[...], x32.astype(ws_ref.dtype),
                      preferred_element_type=jnp.float32)

    o_ref[...] = (x_s + 0.1 * dxv).astype(o_ref.dtype)


# ---------------------------------------------------------------------------
# Wrapper
# ---------------------------------------------------------------------------
def _build_masks_np(H, W, b_tile):
    ys, xs = np.meshgrid(np.arange(H), np.arange(W), indexing="ij")
    rows = []
    for dy, dx in _TAPS:
        ok = ((ys + dy >= 0) & (ys + dy < H) &
              (xs + dx >= 0) & (xs + dx < W))
        rows.append(ok.reshape(-1))
    m = np.stack(rows, 0).astype(np.float32)        # (9, H*W)
    return np.tile(m, (1, b_tile))                  # (9, b_tile*H*W)


def _pick_b_tile(N, HW, max_cols=4096):
    """Largest divisor of N whose column count stays within max_cols."""
    best = 1
    for d in range(1, N + 1):
        if N % d == 0 and d * HW <= max_cols:
            best = d
    return best


@functools.partial(jax.jit, static_argnames=("roll_sign",))
def _resnet_block_call(x, w0f, w1f, ws, *, roll_sign):
    N, Cin, H, W = x.shape
    HW = H * W
    Fout = w1f.shape[0]
    compute_dtype = w0f.dtype

    if HW % 128 != 0:
        # TODO(synk): pad W to a lane multiple and fold the padding into the
        # border masks instead of refusing (masked vst stores cost ~4.5x).
        raise ValueError("H*W must be a multiple of 128 for lane-dense stores")

    b_tile = _pick_b_tile(N, HW)
    cols = b_tile * HW
    n_tiles = N // b_tile

    # Layout plumbing (not compute): lane-dense (Cin, N*H*W) activations.
    x_t = jnp.transpose(x, (1, 0, 2, 3)).reshape(Cin, N * HW)
    masks = jnp.asarray(_build_masks_np(H, W, b_tile)).astype(compute_dtype)

    in_specs = [
        pl.BlockSpec((Cin, cols), lambda t: (0, t)),    # batch-tile of images
        pl.BlockSpec((9, cols), lambda t: (0, 0)),      # resident masks
        pl.BlockSpec(w0f.shape, lambda t: (0, 0)),      # resident weights
        pl.BlockSpec(w1f.shape, lambda t: (0, 0)),
    ]
    args = [x_t, masks, w0f, w1f]
    kw = dict(W=W, cols=cols, roll_sign=roll_sign)

    if ws is not None:
        in_specs.append(pl.BlockSpec(ws.shape, lambda t: (0, 0)))
        args.append(ws)

        def kernel(x_ref, m_ref, w0_ref, w1_ref, ws_ref, o_ref):
            _resnet_body(x_ref, m_ref, w0_ref, w1_ref, ws_ref, o_ref, **kw)
    else:
        if Cin != Fout:
            raise ValueError("identity shortcut requires fin == fout")

        def kernel(x_ref, m_ref, w0_ref, w1_ref, o_ref):
            _resnet_body(x_ref, m_ref, w0_ref, w1_ref, None, o_ref, **kw)

    out_t = pl.pallas_call(
        kernel,
        out_shape=jax.ShapeDtypeStruct((Fout, N * HW), x.dtype),
        grid_spec=pltpu.PrefetchScalarGridSpec(
            num_scalar_prefetch=0,
            grid=(n_tiles,),
            in_specs=in_specs,
            out_specs=pl.BlockSpec((Fout, cols), lambda t: (0, t)),
        ),
        compiler_params=pltpu.CompilerParams(
            dimension_semantics=("parallel",),
            # TODO(synk): parameterize per generation (raise on v5e/v6e when
            # growing band/batch tiles; keep headroom under v7x's 64 MiB).
            vmem_limit_bytes=32 * 1024 * 1024,
        ),
    )(*args)
    return jnp.transpose(out_t.reshape(Fout, N, H, W), (1, 0, 2, 3))


def resnet_block(x, w0f, w1f, ws=None):
    """x: (N, Cin, H, W) NCHW float32.  w0f/w1f/ws from to_kernel_params
    (fused tap-major layout, bias folded in).  ws=None -> identity shortcut."""
    return _resnet_block_call(x, w0f, w1f, ws, roll_sign=_get_roll_sign())


# ---------------------------------------------------------------------------
# Parameters and pure-JAX reference
# ---------------------------------------------------------------------------
def make_params(key, fin, fout, fhidden=None, is_bias=True):
    """Deterministic synthetic parameters in PyTorch Conv2d layout (OIHW)."""
    if fhidden is None:
        fhidden = min(fin, fout)
    k0, k1, k2, k3, k4 = jax.random.split(key, 5)
    w0 = jax.random.normal(k0, (fhidden, fin, 3, 3), jnp.float32) * 0.1
    b0 = jax.random.normal(k1, (fhidden,), jnp.float32) * 0.1
    w1 = jax.random.normal(k2, (fout, fhidden, 3, 3), jnp.float32) * 0.1
    b1 = (jax.random.normal(k3, (fout,), jnp.float32) * 0.1
          if is_bias else jnp.zeros((fout,), jnp.float32))
    ws = (jax.random.normal(k4, (fout, fin), jnp.float32) * 0.1
          if fin != fout else None)          # identity shortcut if fin == fout
    return w0, b0, w1, b1, ws


def to_kernel_params(w0, b0, w1, b1, ws, compute_dtype=jnp.bfloat16):
    """OIHW -> fused (Cout, 9*Cin + 1) tap-major layout with bias column.
    Weight dtype drives the kernel's MXU compute dtype (bf16 default)."""
    def fuse(w, b):
        o = w.shape[0]
        cols = [w[:, :, dy + 1, dx + 1] for dy, dx in _TAPS]   # each (O, I)
        wf = jnp.concatenate(cols + [b.reshape(o, 1)], axis=1)  # (O, 9I+1)
        return wf.astype(compute_dtype)

    w0f = fuse(w0, b0)
    w1f = fuse(w1, b1)
    wsk = None if ws is None else ws.astype(compute_dtype)
    return w0f, w1f, wsk


def reference_resnet_block(x, w0, b0, w1, b1, ws=None):
    """Pure-JAX NCHW reference matching the PyTorch module."""
    hp = jax.lax.Precision.HIGHEST

    def conv3x3(a, w, b):
        y = jax.lax.conv_general_dilated(
            a, w, window_strides=(1, 1), padding="SAME",
            dimension_numbers=("NCHW", "OIHW", "NCHW"), precision=hp)
        return y + b.reshape(1, -1, 1, 1)

    x_s = x if ws is None else jnp.einsum("oc,nchw->nohw", ws, x, precision=hp)
    dx = conv3x3(_leaky_relu(x), w0, b0)
    dx = conv3x3(_leaky_relu(dx), w1, b1)
    return x_s + 0.1 * dx


# ---------------------------------------------------------------------------
if __name__ == "__main__":
    key = jax.random.PRNGKey(0)
    kx1, kp1, kx2, kp2 = jax.random.split(key, 4)

    # Case 1: learned 1x1 shortcut (fin != fout), f32 MXU operands (exact path).
    N, FIN, FOUT, H, W = 2, 4, 8, 16, 16
    x1 = jax.random.normal(kx1, (N, FIN, H, W), jnp.float32)
    p1 = make_params(kp1, FIN, FOUT, fhidden=None, is_bias=True)
    out1 = jax.block_until_ready(
        resnet_block(x1, *to_kernel_params(*p1, compute_dtype=jnp.float32)))
    ref1 = reference_resnet_block(x1, *p1)
    np.testing.assert_allclose(np.asarray(out1), np.asarray(ref1),
                               rtol=2e-3, atol=2e-3)

    # Case 2: identity shortcut (fin == fout), default bf16 MXU operands
    # (f32 accumulation; activations quantized -> looser tolerance expected).
    FIN2 = FOUT2 = 8
    x2 = jax.random.normal(kx2, (N, FIN2, H, W), jnp.float32)
    p2 = make_params(kp2, FIN2, FOUT2, fhidden=None, is_bias=True)
    out2 = jax.block_until_ready(
        resnet_block(x2, *to_kernel_params(*p2)))
    ref2 = reference_resnet_block(x2, *p2)
    np.testing.assert_allclose(np.asarray(out2), np.asarray(ref2),
                               rtol=5e-2, atol=5e-2)

    print("KERNEL_OK")
</pallas_src>

<mosaic_0001>
module attributes {stable_mosaic.version = 11 : i64} {
  func.func @probe(%arg0: memref<1x256xf32, #tpu.memory_space<vmem>>, %arg1: memref<1x256xf32, #tpu.memory_space<vmem>>) attributes {dimension_semantics = [], scalar_prefetch = 0 : i64, scratch_operands = 0 : i64, tpu.core_type = #tpu.core_type<tc>} {
    %c0 = arith.constant 0 : index
    %c0_0 = arith.constant 0 : index
    %0 = vector.load %arg0[%c0, %c0_0] : memref<1x256xf32, #tpu.memory_space<vmem>>, vector<1x256xf32>
    %c1_i32 = arith.constant 1 : i32
    %1 = tpu.dynamic_rotate %0 by %c1_i32 dim 1 : vector<1x256xf32>, i32 -> vector<1x256xf32>
    %c0_1 = arith.constant 0 : index
    %c0_2 = arith.constant 0 : index
    %2 = vector.load %arg1[%c0_1, %c0_2] : memref<1x256xf32, #tpu.memory_space<vmem>>, vector<1x256xf32>
    tpu.vector_store %arg1[%c0_1, %c0_2], %1 {strides = array<i32>} : memref<1x256xf32, #tpu.memory_space<vmem>>, vector<1x256xf32>,
    return
  }
}

</mosaic_0001>

<llo_original>
// kernel: tpu_custom_call.1
$region0: #{tpu_custom_call.1}
  #allocation0 [shape = 'u32[]', space=smem, size = 0x4, offset = 0x4, fixed_abs, tag = 'smem constant byte address 0x4 - core index']
  #allocation1 [shape = 'u32[144,128]{1,0:T(1,128)}', space=vmem, size = 0x12000, scoped, tag = 'internal scratch']
  %s0 = inlined_call_operand.hbm [shape: f32[1,256], index: 0, kind: input, shape index: {}]
  %s1 = inlined_call_operand.hbm [shape: f32[1,256], index: 1, kind: output, shape index: {}]
  %s2 = sld [smem:[#allocation0]]
  $region18: #{tpu_custom_call.1} parent=0
    _
  %s4 = ssub.s32 1, %s2
  %s5 = scalar_select 0, %s4, %s2
  $region1: #{tpu_custom_call.1} parent=0
    #allocation2 [shape = 'u8[1024]{0}', space=vmem, size = 0x400, scoped, tag = 'input window, operand 0, single buffered']
    #allocation3 [shape = 's32[1]{0}', space=sflag, size = 0x4, scoped, tag = 'scoped memory for tpu_custom_call.1']
    #allocation4 [shape = 's32[1]{0}', space=sflag, size = 0x4, scoped, tag = 'scoped memory for tpu_custom_call.1']
    #allocation5 [shape = 'u8[1024]{0}', space=vmem, size = 0x400, scoped, tag = 'output window, operand 0, single buffered']
    %6 = vsyncpa [#allocation3], 0
    %7 = vsyncpa [#allocation4], 0
    // Predicated region
    $region2: #{tpu_custom_call.1} parent=1 // pred_check
      _
    $region3: #{tpu_custom_call.1} parent=1 // pred_check_branch
      %9 = sbr.rel (0) target = $region5
    $region4: #{tpu_custom_call.1} parent=1 // pred_region
      %s11 = ssub.s32 32, 32
      %12 = vsyncadd [#allocation3], %s11
      %s14 = sshll.u32 [#allocation2], 4
      %s15 = int_to_ptr.vmem [resolvable:$true] %s14
      %17 = dma.hbm_to_vmem [thread:$0]  %s0, 32, %s15, [#allocation3]
    $region5: #{tpu_custom_call.1} parent=1 // pred_fallthru
      _
    // Predicated region
    $region6: #{tpu_custom_call.1} parent=1 // pred_check
      _
    $region7: #{tpu_custom_call.1} parent=1 // pred_check_branch
      %19 = sbr.rel (0) target = $region9
    $region8: #{tpu_custom_call.1} parent=1 // pred_region
      %20 = dma.done [#allocation3], 32
    $region9: #{tpu_custom_call.1} parent=1 // pred_fallthru
      _
    %v21 = vld [vmem:[#allocation2] sm:$0x3]
    %v23 = vlaneseq
    %v24 = vshrl.u32 %v23, 7
    %v25 = vsub.s32 0, %v24
    %v26 = vrot.slane %v21, %v25
    %v27 = vlaneseq
    %v28 = vshrl.u32 %v27, 7
    %v29 = vsub.s32 1, %v28
    %v30 = vrot.slane %v21, %v29
    %33 = vrot.lane.b32.xlu0 %v26, 1
    %v34 = vpop.permute.xlu0 %33
    %35 = vrot.lane.b32.xlu0 %v30, 1
    %v36 = vpop.permute.xlu0 %35
    %v37 = vlaneseq
    %v38 = vand.u32 %v37, 127
    %vm39 = vcmp.lt.s32.totalorder %v38, 1
    %v40 = vsel %vm39, %v34, %v36
    %v41 = vsel %vm39, %v36, %v34
    %v44 = vcombine.low %v41, %v40
    %v46 = vunpack.c.l.s4 1966171168
    %v47 = vunpack.c.0.s8 %v46
    %v48 = vlaneseq
    %v49 = vshrl.u32 %v48, 7
    %v50 = vsub.s32 %v47, %v49
    %v51 = vrot.slane %v44, %v50
    %v53 = vunpack.c.l.s4 1966171168
    %v54 = vunpack.c.0.s8 %v53
    %v55 = vlaneseq
    %v56 = vshrl.u32 %v55, 7
    %v57 = vsub.s32 %v54, %v56
    %v58 = vrot.slane %v51, %v57
    %v60 = vlaneseq
    %vm61 = vcmp.ge.s32.totalorder %v60, 0
    %vm62 = vcmp.lt.s32.totalorder %v60, 256
    %vm63 = vmand %vm61, %vm62
    %64 = vst.msk [vmem:[#allocation5] sm:$0x3] %vm63, %v58
    // Predicated region
    $region10: #{tpu_custom_call.1} parent=1 // pred_check
      _
    $region11: #{tpu_custom_call.1} parent=1 // pred_check_branch
      %66 = sbr.rel (0) target = $region13
    $region12: #{tpu_custom_call.1} parent=1 // pred_region
      %s68 = ssub.s32 32, 32
      %69 = vsyncadd [#allocation4], %s68
      %s71 = sshll.u32 [#allocation5], 4
      %s72 = int_to_ptr.vmem [resolvable:$true] %s71
      %74 = dma.vmem_to_hbm [thread:$0]  %s72, 32, %s1, [#allocation4]
    $region13: #{tpu_custom_call.1} parent=1 // pred_fallthru
      _
    // Predicated region
    $region14: #{tpu_custom_call.1} parent=1 // pred_check
      _
    $region15: #{tpu_custom_call.1} parent=1 // pred_check_branch
      %76 = sbr.rel (0) target = $region17
    $region16: #{tpu_custom_call.1} parent=1 // pred_region
      %77 = dma.done [#allocation4], 32
    $region17: #{tpu_custom_call.1} parent=1 // pred_fallthru
      _
    %78 = vsyncpa [#allocation3], 1
    %79 = vsyncpa [#allocation4], 1

</llo_original>
